<compile_context>
chip_gen: v5e
topology: v5e:2x2
jax: 0.10.0
libtpu: 0.0.40
codegen_flags: <defaults>
</compile_context>

<pallas_src>
import functools

import jax
import jax.numpy as jnp
from jax.experimental import pallas as pl
from jax.experimental.pallas import tpu as pltpu

# Safe sublane multiple for f32 (8), bf16 (16) and int8/bool (32) tiles.
_SUBLANE = 32


def _round_up(n: int, m: int) -> int:
    return ((n + m - 1) // m) * m


def _neg_fill_for(dtype):
    """Dtype-aware 'very negative' logit fill (finite; exact for ints)."""
    dtype = jnp.dtype(dtype)
    if jnp.issubdtype(dtype, jnp.floating):
        # -1e9 for f32/bf16; ~ -3.3e4 for f16 (finfo.min / 2), never -inf.
        return max(-1e9, float(jnp.finfo(dtype).min) / 2.0)
    if jnp.issubdtype(dtype, jnp.integer):
        return int(jnp.iinfo(dtype).min // 2)
    raise TypeError(f"unsupported logits dtype: {dtype}")


def _mask_logits_kernel(x_ref, mask_ref, o_ref, *, fill):
    # Pure VPU elementwise select on the current (TB, A) VMEM tile.
    # Mask is read at its NATIVE dtype; nonzero => action is INVALID.
    invalid = mask_ref[...] != 0
    # `fill` is a weakly-typed Python scalar -> no full-tile broadcast constant
    # and no float round-trip for integer logits.
    o_ref[...] = jnp.where(invalid, fill, x_ref[...]).astype(o_ref.dtype)


def abstract_agent_forward(x, invalid_action_mask, *,
                           target_x_bytes_per_step=2 * 1024 * 1024):
    """out[b, a] = x[b, a] if invalid_action_mask[b, a] == 0 else NEG_FILL."""
    assert x.ndim == 2, "expected (batch, num_actions) logits"
    assert x.shape == invalid_action_mask.shape, "x / mask shape mismatch"
    B, A = x.shape
    dtype = x.dtype
    itemsize = jnp.dtype(dtype).itemsize
    m_itemsize = jnp.dtype(invalid_action_mask.dtype).itemsize
    fill = _neg_fill_for(dtype)

    # --- Row-tile size, chosen by bytes (not rows) -------------------------
    # ~target_x_bytes_per_step of x per grid step hides the ~0.35 us/step grid
    # overhead on the HBM-bound stream; rounded to a sublane-safe multiple.
    tb = max(_SUBLANE, target_x_bytes_per_step // max(1, A * itemsize))
    tb = _round_up(tb, _SUBLANE)
    # Keep >= 2 grid steps when the batch allows so v7x's two TensorCores can
    # split the "parallel" axis (measured-neutral on v5e/v6e).
    if B > _SUBLANE:
        tb = min(tb, _round_up(pl.cdiv(B, 2), _SUBLANE))
    # Never larger than the (rounded-up) batch.
    tb = min(tb, _round_up(B, _SUBLANE))

    grid = (pl.cdiv(B, tb),)

    # Double-buffered resident VMEM: x + out + mask tiles, 2 buffers each.
    resident = 2 * tb * A * (2 * itemsize + m_itemsize)
    vmem_limit = int(min(48 * 1024 * 1024, max(16 * 1024 * 1024, 2 * resident)))

    kernel = functools.partial(_mask_logits_kernel, fill=fill)

    return pl.pallas_call(
        kernel,
        out_shape=jax.ShapeDtypeStruct((B, A), dtype),
        grid=grid,
        in_specs=[
            pl.BlockSpec((tb, A), lambda i: (i, 0)),   # logits tile
            pl.BlockSpec((tb, A), lambda i: (i, 0)),   # mask tile (native dtype)
        ],
        out_specs=pl.BlockSpec((tb, A), lambda i: (i, 0)),
        compiler_params=pltpu.CompilerParams(
            dimension_semantics=("parallel",),
            vmem_limit_bytes=vmem_limit,
        ),
        cost_estimate=pl.CostEstimate(
            flops=B * A,
            transcendentals=0,
            bytes_accessed=B * A * (2 * itemsize + m_itemsize),
        ),
    )(x, invalid_action_mask)


if __name__ == "__main__":
    key = jax.random.PRNGKey(0)
    k_x, k_m = jax.random.split(key)

    # Small shapes consistent with an RL agent: batch=48, 18 discrete actions.
    # A=18 (< 128) exercises the unpadded, ragged-lane path; B=48 with the
    # sublane-rounded tile gives a 2-step grid, exercising the pipelined path.
    B, A = 48, 18
    x = jax.random.normal(k_x, (B, A), dtype=jnp.float32)
    # nonzero => invalid; supplied as int8 at the API boundary (no wrapper cast).
    invalid_action_mask = (
        jax.random.uniform(k_m, (B, A)) < 0.25
    ).astype(jnp.int8)

    out = abstract_agent_forward(x, invalid_action_mask)
    out = jax.block_until_ready(out)

    # Reference check in plain JAX.
    fill = _neg_fill_for(x.dtype)
    ref = jnp.where(invalid_action_mask != 0, jnp.asarray(fill, x.dtype), x)
    assert out.shape == (B, A) and out.dtype == x.dtype
    assert bool(jnp.allclose(out, ref)), "mismatch vs reference"

    print("KERNEL_OK")
</pallas_src>

<mosaic_0001>
module attributes {stable_mosaic.version = 11 : i64} {
  func.func @_mask_logits_kernel(%arg0: i32, %arg1: memref<32x18xf32, #tpu.memory_space<vmem>>, %arg2: memref<32x18xi8, #tpu.memory_space<vmem>>, %arg3: memref<32x18xf32, #tpu.memory_space<vmem>>) attributes {dimension_semantics = [#tpu.dimension_semantics<parallel>], iteration_bounds = array<i64: 2>, scalar_prefetch = 0 : i64, scratch_operands = 0 : i64, tpu.core_type = #tpu.core_type<tc>, window_params = [{transform_indices = @transform_0, window_bounds = array<i64: 32, 18>}, {transform_indices = @transform_1, window_bounds = array<i64: 32, 18>}, {transform_indices = @transform_2, window_bounds = array<i64: 32, 18>}]} {
    %c0 = arith.constant 0 : index
    %c0_0 = arith.constant 0 : index
    %0 = vector.load %arg2[%c0, %c0_0] : memref<32x18xi8, #tpu.memory_space<vmem>>, vector<32x18xi8>
    %c0_i8 = arith.constant 0 : i8
    %1 = vector.broadcast %c0_i8 : i8 to vector<32x18xi8>
    %2 = arith.cmpi ne, %0, %1 : vector<32x18xi8>
    %c0_1 = arith.constant 0 : index
    %c0_2 = arith.constant 0 : index
    %3 = vector.load %arg1[%c0_1, %c0_2] : memref<32x18xf32, #tpu.memory_space<vmem>>, vector<32x18xf32>
    %cst = arith.constant -1.000000e+09 : f32
    %4 = vector.broadcast %cst : f32 to vector<32x18xf32>
    %5 = arith.select %2, %4, %3 : vector<32x18xi1>, vector<32x18xf32>
    %c0_3 = arith.constant 0 : index
    %c0_4 = arith.constant 0 : index
    %6 = vector.load %arg3[%c0_3, %c0_4] : memref<32x18xf32, #tpu.memory_space<vmem>>, vector<32x18xf32>
    tpu.vector_store %arg3[%c0_3, %c0_4], %5 {strides = array<i32>} : memref<32x18xf32, #tpu.memory_space<vmem>>, vector<32x18xf32>,
    return
  }
  func.func @transform_0(%arg0: i32) -> (i32, i32) {
    %c0_i32 = arith.constant 0 : i32
    %c0_i32_0 = arith.constant 0 : i32
    return %arg0, %c0_i32 : i32, i32
  }
  func.func @transform_1(%arg0: i32) -> (i32, i32) {
    %c0_i32 = arith.constant 0 : i32
    %c0_i32_0 = arith.constant 0 : i32
    return %arg0, %c0_i32 : i32, i32
  }
  func.func @transform_2(%arg0: i32) -> (i32, i32) {
    %c0_i32 = arith.constant 0 : i32
    %c0_i32_0 = arith.constant 0 : i32
    return %arg0, %c0_i32 : i32, i32
  }
}

</mosaic_0001>

<llo_original>
// kernel: tpu_custom_call.1
$region0: #{tpu_custom_call.1}
  #allocation0 [shape = 'u32[]', space=smem, size = 0x4, offset = 0x4, fixed_abs, tag = 'smem constant byte address 0x4 - core index']
  #allocation1 [shape = 'u32[72,128]{1,0:T(1,128)}', space=vmem, size = 0x9000, scoped, tag = 'internal scratch']
  %s0 = inlined_call_operand.vmem [shape: f32[48,18], index: 0, kind: input, shape index: {}]
  %s1 = inlined_call_operand.vmem [shape: s8[48,18], index: 1, kind: input, shape index: {}]
  %s2 = inlined_call_operand.vmem [shape: f32[48,18], index: 2, kind: output, shape index: {}]
  %s3 = sld [smem:[#allocation0]]
  $region89: #{tpu_custom_call.1} parent=0
    _
  %s5 = ssub.s32 1, %s3
  %s6 = scalar_select 0, %s5, %s3
  $region1: #{tpu_custom_call.1} parent=0
    #allocation2 [shape = 'u8[32768]{0}', space=vmem, size = 0x8000, scoped, tag = 'output window, operand 0']
    loop: start=0, step=1, limit=4
    $region2: #{tpu_custom_call.1} parent=1 // loop_pre_header
      _
    $region3: #{tpu_custom_call.1} parent=1 // loop_header
      %s8 = sphi 0, %s12
      %p9 = scmp.ge.s32.totalorder %s8, 4
      %s18 = sphi 0, %s20
      %s21 = sphi 0, %s18
      %s22 = sphi 0, %s21
      %s38 = sphi 0, %s22
      %s44 = sphi 0, %s46
      %s47 = sphi 0, %s44
      %s48 = sphi 0, %s47
      %s64 = sphi 0, %s48
      %s70 = sphi 0, %s72
      %s73 = sphi 0, %s70
      %s74 = sphi 0, %s73
      %s90 = sphi 0, %s74
    $region4: #{tpu_custom_call.1} parent=1 // loop_header_branch
      %11 = sbr.rel (%p9) target = $region8
    $region5: #{tpu_custom_call.1} parent=1 // loop_body
      %s13 = ssub.s32 %s8, 1
      %s14 = ssub.s32 %s8, 2
      %s15 = sadd.s32 %s8, 1
      %s16 = ssub.s32 %s8, %s15
      %p17 = scmp.eq.s32.totalorder %s16, 0
      %s19 = sadd.s32 %s18, 1
      %s20 = scalar_select %p17, %s18, %s19
      %p23 = pneg %p17
      %p24 = scmp.eq.s32.totalorder %s8, 1
      %p25 = por %p23, %p24
      %p26 = scmp.ne.s32.totalorder %s18, %s21
      %p27 = scmp.eq.s32.totalorder %s8, 0
      %p28 = por %p26, %p27
      %p29 = scmp.ne.s32.totalorder %s18, %s21
      %p30 = scmp.eq.s32.totalorder %s13, 1
      %p31 = por %p29, %p30
      %p32 = scmp.ne.s32.totalorder %s21, %s22
      %p33 = scmp.eq.s32.totalorder %s13, 0
      %p34 = por %p32, %p33
      %p35 = scmp.ne.s32.totalorder %s21, %s22
      %p36 = scmp.eq.s32.totalorder %s14, 1
      %p37 = por %p35, %p36
      %p39 = scmp.ne.s32.totalorder %s22, %s38
      %p40 = scmp.eq.s32.totalorder %s14, 0
      %p41 = por %p39, %p40
      %s42 = ssub.s32 %s8, %s15
      %p43 = scmp.eq.s32.totalorder %s42, 0
      %s45 = sadd.s32 %s44, 1
      %s46 = scalar_select %p43, %s44, %s45
      %p49 = pneg %p43
      %p50 = scmp.eq.s32.totalorder %s8, 1
      %p51 = por %p49, %p50
      %p52 = scmp.ne.s32.totalorder %s44, %s47
      %p53 = scmp.eq.s32.totalorder %s8, 0
      %p54 = por %p52, %p53
      %p55 = scmp.ne.s32.totalorder %s44, %s47
      %p56 = scmp.eq.s32.totalorder %s13, 1
      %p57 = por %p55, %p56
      %p58 = scmp.ne.s32.totalorder %s47, %s48
      %p59 = scmp.eq.s32.totalorder %s13, 0
      %p60 = por %p58, %p59
      %p61 = scmp.ne.s32.totalorder %s47, %s48
      %p62 = scmp.eq.s32.totalorder %s14, 1
      %p63 = por %p61, %p62
      %p65 = scmp.ne.s32.totalorder %s48, %s64
      %p66 = scmp.eq.s32.totalorder %s14, 0
      %p67 = por %p65, %p66
      %s68 = ssub.s32 %s8, %s15
      %p69 = scmp.eq.s32.totalorder %s68, 0
      %s71 = sadd.s32 %s70, 1
      %s72 = scalar_select %p69, %s70, %s71
      %p75 = pneg %p69
      %p76 = scmp.eq.s32.totalorder %s8, 1
      %p77 = por %p75, %p76
      %p78 = scmp.ne.s32.totalorder %s70, %s73
      %p79 = scmp.eq.s32.totalorder %s8, 0
      %p80 = por %p78, %p79
      %p81 = scmp.ne.s32.totalorder %s70, %s73
      %p82 = scmp.eq.s32.totalorder %s13, 1
      %p83 = por %p81, %p82
      %p84 = scmp.ne.s32.totalorder %s73, %s74
      %p85 = scmp.eq.s32.totalorder %s13, 0
      %p86 = por %p84, %p85
      %p87 = scmp.ne.s32.totalorder %s73, %s74
      %p88 = scmp.eq.s32.totalorder %s14, 1
      %p89 = por %p87, %p88
      %p91 = scmp.ne.s32.totalorder %s74, %s90
      %p92 = scmp.eq.s32.totalorder %s14, 0
      %p93 = por %p91, %p92
      %p94 = scmp.le.s32.totalorder 1, %s8
      %p95 = scmp.lt.s32.totalorder %s8, 3
      %p96 = pnand %p94, %p95
      %p97 = pneg %p96
      // Predicated region
      $region9: #{tpu_custom_call.1} parent=5 // pred_check
        _
      $region10: #{tpu_custom_call.1} parent=5 // pred_check_branch
        %99 = sbr.rel (%p96) target = $region12
      $region11: #{tpu_custom_call.1} parent=5 // pred_region
        %s100 = ssub.s32 %s8, 1
      $region12: #{tpu_custom_call.1} parent=5 // pred_fallthru
        _
      %p101 = scmp.lt.s32.totalorder %s8, 2
      // Predicated region
      $region13: #{tpu_custom_call.1} parent=5 // pred_check
        %p102 = pneg %p101
      $region14: #{tpu_custom_call.1} parent=5 // pred_check_branch
        %104 = sbr.rel (%p102) target = $region16
      $region15: #{tpu_custom_call.1} parent=5 // pred_region
        // Predicated region
        $region17: #{tpu_custom_call.1} parent=15 // pred_check
          %p105 = pneg %p28
        $region18: #{tpu_custom_call.1} parent=15 // pred_check_branch
          %107 = sbr.rel (%p105) target = $region20
        $region19: #{tpu_custom_call.1} parent=15 // pred_region
          %s108 = smul.u32 4, %s8
          %s109 = ssub.s32 6, %s108
          %p110 = scmp.lt.s32.totalorder %s109, 4
          %s111 = scalar_select %p110, %s109, 4
          %s112 = smul.u32 8, %s111
          %p113 = scmp.lt.s32.totalorder %s108, 5
          %s114 = scalar_select %p113, %s108, 5
          %s115 = smul.addr %s114, 8
          %s116 = scalar_lea.vmem %s0, %s115
          %s117 = smul.u32 4, %s8
          %s118 = ssub.s32 6, %s117
          %p119 = scmp.lt.s32.totalorder %s118, 4
          %s120 = scalar_select %p119, %s118, 4
          %s121 = smul.u32 8, %s120
        $region20: #{tpu_custom_call.1} parent=15 // pred_fallthru
          _
        // Predicated region
        $region21: #{tpu_custom_call.1} parent=15 // pred_check
          %p122 = pneg %p54
        $region22: #{tpu_custom_call.1} parent=15 // pred_check_branch
          %124 = sbr.rel (%p122) target = $region24
        $region23: #{tpu_custom_call.1} parent=15 // pred_region
          %s125 = smul.u32 4, %s8
          %s126 = ssub.s32 6, %s125
          %p127 = scmp.lt.s32.totalorder %s126, 4
          %s128 = scalar_select %p127, %s126, 4
          %s129 = smul.u32 2, %s128
          %p130 = scmp.lt.s32.totalorder %s125, 5
          %s131 = scalar_select %p130, %s125, 5
          %s132 = smul.addr %s131, 2
          %s133 = scalar_lea.vmem %s1, %s132
          %s134 = smul.u32 4, %s8
          %s135 = ssub.s32 6, %s134
          %p136 = scmp.lt.s32.totalorder %s135, 4
          %s137 = scalar_select %p136, %s135, 4
          %s138 = smul.u32 2, %s137
        $region24: #{tpu_custom_call.1} parent=15 // pred_fallthru
          _
      $region16: #{tpu_custom_call.1} parent=5 // pred_fallthru
        _
      %p139 = scmp.le.s32.totalorder 1, %s8
      %p140 = scmp.lt.s32.totalorder %s8, 3
      %p141 = pnand %p139, %p140
      %p142 = pneg %p141
      // Predicated region
      $region25: #{tpu_custom_call.1} parent=5 // pred_check
        _
      $region26: #{tpu_custom_call.1} parent=5 // pred_check_branch
        %144 = sbr.rel (%p141) target = $region28
      $region27: #{tpu_custom_call.1} parent=5 // pred_region
        %s145 = ssub.s32 %s8, 1
        %s146 = smul.u32 4, %s13
        %s147 = ssub.s32 6, %s146
        %p148 = scmp.lt.s32.totalorder %s147, 4
        %s149 = scalar_select %p148, %s147, 4
        %s150 = smul.u32 8, %s149
        %p151 = scmp.lt.s32.totalorder %s146, 5
        %s152 = scalar_select %p151, %s146, 5
        %s153 = smul.addr %s152, 8
        %s154 = scalar_lea.vmem %s0, %s153
        %p155 = pneg %p34
        %p156 = pneg %p31
        %s157 = smul.u32 4, %s13
        %s158 = ssub.s32 6, %s157
        %p159 = scmp.lt.s32.totalorder %s158, 4
        %s160 = scalar_select %p159, %s158, 4
        %s161 = smul.u32 2, %s160
        %p162 = scmp.lt.s32.totalorder %s157, 5
        %s163 = scalar_select %p162, %s157, 5
        %s164 = smul.addr %s163, 2
        %s165 = scalar_lea.vmem %s1, %s164
        %p166 = pneg %p60
        %p167 = pneg %p57
        %p168 = pneg %p86
        %p169 = pneg %p83
        %s170 = sand.u32 %s73, 1
        %s171 = sand.u32 %s73, 1
        %s172 = smul.addr %s171, 32
        %s173 = scalar_lea.vmem [#allocation2], %s172
        %s174 = smul.u32 4, %s13
        %s175 = ssub.s32 6, %s174
        %p176 = scmp.lt.s32.totalorder %s175, 4
        %s177 = scalar_select %p176, %s175, 4
        %s178 = smul.u32 8, %s177
        %p179 = scmp.lt.s32.totalorder %s174, 5
        %s180 = scalar_select %p179, %s174, 5
        %s181 = smul.addr %s180, 8
        %s182 = scalar_lea.vmem %s0, %s181
        %s183 = smul.u32 4, %s13
        %s184 = ssub.s32 6, %s183
        %p185 = scmp.lt.s32.totalorder %s184, 4
        %s186 = scalar_select %p185, %s184, 4
        %s187 = smul.u32 8, %s186
        %s188 = smul.u32 4, %s13
        %s189 = ssub.s32 6, %s188
        %p190 = scmp.lt.s32.totalorder %s189, 4
        %s191 = scalar_select %p190, %s189, 4
        %s192 = smul.u32 2, %s191
        %p193 = scmp.lt.s32.totalorder %s188, 5
        %s194 = scalar_select %p193, %s188, 5
        %s195 = smul.addr %s194, 2
        %s196 = scalar_lea.vmem %s1, %s195
        %s197 = smul.u32 4, %s13
        %s198 = ssub.s32 6, %s197
        %p199 = scmp.lt.s32.totalorder %s198, 4
        %s200 = scalar_select %p199, %s198, 4
        %s201 = smul.u32 2, %s200
        %s202 = smul.u32 4, %s13
        %s203 = ssub.s32 6, %s202
        %p204 = scmp.lt.s32.totalorder %s203, 4
        %s205 = scalar_select %p204, %s203, 4
        %s206 = smul.u32 8, %s205
        %v209 = vld [vmem:[%s196] sm:$0x3]
        %v210 = vld [vmem:[%s196 + $0x2] sm:$0x3]
        %v211 = vld [vmem:[%s196 + $0x4] sm:$0x3]
        %v212 = vld [vmem:[%s196 + $0x6] sm:$0x3]
        %vm213 = vnez %v209
        %vm214 = vnez %v210
        %vm215 = vnez %v211
        %vm216 = vnez %v212
        %v217 = vld [vmem:[%s182] sm:$0xff]
        %v218 = vld [vmem:[%s182 + $0x8] sm:$0xff]
        %v219 = vld [vmem:[%s182 + $0x10] sm:$0xff]
        %v220 = vld [vmem:[%s182 + $0x18] sm:$0xff]
        %v221 = vsel %vm213, 16843009, 0
        %v222 = vsel %vm214, 16843009, 0
        %v223 = vsel %vm215, 16843009, 0
        %v224 = vsel %vm216, 16843009, 0
        %v225 = vunpack.c.0.s8 %v221
        %v226 = vunpack.c.0.s8 %v222
        %v227 = vunpack.c.0.s8 %v223
        %v228 = vunpack.c.0.s8 %v224
        %vm229 = vcmp.ne.s32.totalorder %v225, 0
        %vm230 = vcmp.ne.s32.totalorder %v226, 0
        %vm231 = vcmp.ne.s32.totalorder %v227, 0
        %vm232 = vcmp.ne.s32.totalorder %v228, 0
        %v233 = vsel %vm229, -1e+09, %v217
        %v234 = vsel %vm230, -1e+09, %v218
        %v235 = vsel %vm231, -1e+09, %v219
        %v236 = vsel %vm232, -1e+09, %v220
        %vm237 = vcmask 146432
        %238 = vst.msk [vmem:[%s173] sm:$0xff] %vm237, %v233
        %239 = vst.msk [vmem:[%s173 + $0x8] sm:$0xff] %vm237, %v234
        %240 = vst.msk [vmem:[%s173 + $0x10] sm:$0xff] %vm237, %v235
        %241 = vst.msk [vmem:[%s173 + $0x18] sm:$0xff] %vm237, %v236
        %s242 = sand.u32 %s73, 1
        %s243 = sand.u32 %s73, 1
        %s244 = smul.addr %s243, 32
        %s245 = scalar_lea.vmem [#allocation2], %s244
        // Predicated region
        $region29: #{tpu_custom_call.1} parent=27 // pred_check
          %p246 = pneg %p83
        $region30: #{tpu_custom_call.1} parent=27 // pred_check_branch
          %248 = sbr.rel (%p246) target = $region32
        $region31: #{tpu_custom_call.1} parent=27 // pred_region
          %s249 = smul.u32 4, %s13
          %s250 = ssub.s32 6, %s249
          %p251 = scmp.lt.s32.totalorder %s250, 4
          %s252 = scalar_select %p251, %s250, 4
          %s253 = smul.u32 8, %s252
          %p254 = scmp.ne.s32.totalorder 0, %s253
          %s255 = smul.addr %s249, 8
          %s256 = scalar_lea.vmem %s2, %s255
          // Predicated region
          $region33: #{tpu_custom_call.1} parent=31 // pred_check
            %p257 = pneg %p254
          $region34: #{tpu_custom_call.1} parent=31 // pred_check_branch
            %259 = sbr.rel (%p257) target = $region36
          $region35: #{tpu_custom_call.1} parent=31 // pred_region
            // Predicated region
            $region37: #{tpu_custom_call.1} parent=35 // pred_check
              _
            $region38: #{tpu_custom_call.1} parent=35 // pred_check_branch
              %261 = sbr.rel (0) target = $region40
            $region39: #{tpu_custom_call.1} parent=35 // pred_region
              // Predicated region
              $region59: #{tpu_custom_call.1} parent=39 // pred_check
                _
              $region60: #{tpu_custom_call.1} parent=39 // pred_check_branch
                %317 = sbr.rel (0) target = $region62
              $region61: #{tpu_custom_call.1} parent=39 // pred_region
                %s318 = sshrl.u32 %s252, 2
                // While loop
                $region63: #{tpu_custom_call.1} parent=61 // loop_pre_header
                  _
                $region64: #{tpu_custom_call.1} parent=61 // loop_header
                  %s320 = sphi 0, %s322
                  %p321 = scmp.ge.s32.totalorder %s320, %s318
                  %s325 = sphi 0, %s338
                  %s326 = sphi %s245, %s341
                  %s327 = sphi %s256, %s342
                $region65: #{tpu_custom_call.1} parent=61 // loop_header_branch
                  %324 = sbr.rel (%p321) target = $region69
                $region66: #{tpu_custom_call.1} parent=61 // loop_body
                  %v328 = vld [vmem:[%s326] sm:$0xff]
                  %329 = vst [vmem:[%s327] sm:$0xff] %v328
                  %v330 = vld [vmem:[%s326 + $0x8] sm:$0xff]
                  %331 = vst [vmem:[%s327 + $0x8] sm:$0xff] %v330
                  %v332 = vld [vmem:[%s326 + $0x10] sm:$0xff]
                  %333 = vst [vmem:[%s327 + $0x10] sm:$0xff] %v332
                  %v334 = vld [vmem:[%s326 + $0x18] sm:$0xff]
                  %335 = vst [vmem:[%s327 + $0x18] sm:$0xff] %v334
                  %s336 = sadd.s32 1, %s325
                  %p337 = scmp.ge.s32.totalorder %s336, %s318
                  %s338 = scalar_select %p337, 0, %s336
                  %s339 = smul.u32 %s338, 32
                  %s340 = smul.u32 %s338, 32
                  %s341 = scalar_lea.vmem %s245, %s339 [#allocation2]
                  %s342 = scalar_lea.vmem %s256, %s340
                $region67: #{tpu_custom_call.1} parent=61 // loop_footer
                  %s322 = sadd.s32 %s320, 1
                $region68: #{tpu_custom_call.1} parent=61 // loop_footer_branch
                  %319 = sbr.rel target = $region64
                $region69: #{tpu_custom_call.1} parent=61 // loop_exit
                  _
                %s343 = sshrl.u32 %s252, 2
                %s344 = sand.u32 %s252, 3
                %s345 = smul.u32 %s343, 4
                %s346 = smul.u32 8, %s345
                %s347 = scalar_lea.vmem %s245, %s346 [#allocation2]
                %s348 = smul.u32 8, %s345
                %s349 = scalar_lea.vmem %s256, %s348
                // While loop
                $region70: #{tpu_custom_call.1} parent=61 // loop_pre_header
                  _
                $region71: #{tpu_custom_call.1} parent=61 // loop_header
                  %s351 = sphi 0, %s353
                  %p352 = scmp.ge.s32.totalorder %s351, %s344
                  %s356 = sphi 0, %s363
                  %s357 = sphi %s347, %s366
                  %s358 = sphi %s349, %s367
                $region72: #{tpu_custom_call.1} parent=61 // loop_header_branch
                  %355 = sbr.rel (%p352) target = $region76
                $region73: #{tpu_custom_call.1} parent=61 // loop_body
                  %v359 = vld [vmem:[%s357] sm:$0xff]
                  %360 = vst [vmem:[%s358] sm:$0xff] %v359
                  %s361 = sadd.s32 1, %s356
                  %p362 = scmp.ge.s32.totalorder %s361, %s344
                  %s363 = scalar_select %p362, 0, %s361
                  %s364 = smul.u32 %s363, 8
                  %s365 = smul.u32 %s363, 8
                  %s366 = scalar_lea.vmem %s347, %s364 [#allocation2]
                  %s367 = scalar_lea.vmem %s349, %s365
                $region74: #{tpu_custom_call.1} parent=61 // loop_footer
                  %s353 = sadd.s32 %s351, 1
                $region75: #{tpu_custom_call.1} parent=61 // loop_footer_branch
                  %350 = sbr.rel target = $region71
                $region76: #{tpu_custom_call.1} parent=61 // loop_exit
                  _
              $region62: #{tpu_custom_call.1} parent=39 // pred_fallthru
                _
              // Predicated region
              $region77: #{tpu_custom_call.1} parent=39 // pred_check
                _
              $region78: #{tpu_custom_call.1} parent=39 // pred_check_branch
                %369 = sbr.rel target = $region80
              $region79: #{tpu_custom_call.1} parent=39 // pred_region
                _
              $region80: #{tpu_custom_call.1} parent=39 // pred_fallthru
                _
            $region40: #{tpu_custom_call.1} parent=35 // pred_fallthru
              _
            // Predicated region
            $region41: #{tpu_custom_call.1} parent=35 // pred_check
              _
            $region42: #{tpu_custom_call.1} parent=35 // pred_check_branch
              %263 = sbr.rel target = $region44
            $region43: #{tpu_custom_call.1} parent=35 // pred_region
              %s265 = ssub.s32 256, 1
              %s266 = sshrl.u32 %s252, 2
              // While loop
              $region45: #{tpu_custom_call.1} parent=43 // loop_pre_header
                _
              $region46: #{tpu_custom_call.1} parent=43 // loop_header
                %s268 = sphi 0, %s270
                %p269 = scmp.ge.s32.totalorder %s268, %s266
                %s273 = sphi 0, %s286
                %s274 = sphi %s245, %s289
                %s275 = sphi %s256, %s290
              $region47: #{tpu_custom_call.1} parent=43 // loop_header_branch
                %272 = sbr.rel (%p269) target = $region51
              $region48: #{tpu_custom_call.1} parent=43 // loop_body
                %v276 = vld [vmem:[%s274] sm:%s265]
                %277 = vst [vmem:[%s275] sm:%s265] %v276
                %v278 = vld [vmem:[%s274 + $0x8] sm:%s265]
                %279 = vst [vmem:[%s275 + $0x8] sm:%s265] %v278
                %v280 = vld [vmem:[%s274 + $0x10] sm:%s265]
                %281 = vst [vmem:[%s275 + $0x10] sm:%s265] %v280
                %v282 = vld [vmem:[%s274 + $0x18] sm:%s265]
                %283 = vst [vmem:[%s275 + $0x18] sm:%s265] %v282
                %s284 = sadd.s32 1, %s273
                %p285 = scmp.ge.s32.totalorder %s284, %s266
                %s286 = scalar_select %p285, 0, %s284
                %s287 = smul.u32 %s286, 32
                %s288 = smul.u32 %s286, 32
                %s289 = scalar_lea.vmem %s245, %s287 [#allocation2]
                %s290 = scalar_lea.vmem %s256, %s288
              $region49: #{tpu_custom_call.1} parent=43 // loop_footer
                %s270 = sadd.s32 %s268, 1
              $region50: #{tpu_custom_call.1} parent=43 // loop_footer_branch
                %267 = sbr.rel target = $region46
              $region51: #{tpu_custom_call.1} parent=43 // loop_exit
                _
              %s291 = sshrl.u32 %s252, 2
              %s292 = sand.u32 %s252, 3
              %s293 = smul.u32 %s291, 4
              %s294 = smul.u32 8, %s293
              %s295 = scalar_lea.vmem %s245, %s294 [#allocation2]
              %s296 = smul.u32 8, %s293
              %s297 = scalar_lea.vmem %s256, %s296
              // While loop
              $region52: #{tpu_custom_call.1} parent=43 // loop_pre_header
                _
              $region53: #{tpu_custom_call.1} parent=43 // loop_header
                %s299 = sphi 0, %s301
                %p300 = scmp.ge.s32.totalorder %s299, %s292
                %s304 = sphi 0, %s311
                %s305 = sphi %s295, %s314
                %s306 = sphi %s297, %s315
              $region54: #{tpu_custom_call.1} parent=43 // loop_header_branch
                %303 = sbr.rel (%p300) target = $region58
              $region55: #{tpu_custom_call.1} parent=43 // loop_body
                %v307 = vld [vmem:[%s305] sm:%s265]
                %308 = vst [vmem:[%s306] sm:%s265] %v307
                %s309 = sadd.s32 1, %s304
                %p310 = scmp.ge.s32.totalorder %s309, %s292
                %s311 = scalar_select %p310, 0, %s309
                %s312 = smul.u32 %s311, 8
                %s313 = smul.u32 %s311, 8
                %s314 = scalar_lea.vmem %s295, %s312 [#allocation2]
                %s315 = scalar_lea.vmem %s297, %s313
              $region56: #{tpu_custom_call.1} parent=43 // loop_footer
                %s301 = sadd.s32 %s299, 1
              $region57: #{tpu_custom_call.1} parent=43 // loop_footer_branch
                %298 = sbr.rel target = $region53
              $region58: #{tpu_custom_call.1} parent=43 // loop_exit
                _
            $region44: #{tpu_custom_call.1} parent=35 // pred_fallthru
              _
          $region36: #{tpu_custom_call.1} parent=31 // pred_fallthru
            _
          %370 = vnop
        $region32: #{tpu_custom_call.1} parent=27 // pred_fallthru
          _
      $region28: #{tpu_custom_call.1} parent=5 // pred_fallthru
        _
      %p371 = scmp.le.s32.totalorder 2, %s8
      // Predicated region
      $region81: #{tpu_custom_call.1} parent=5 // pred_check
        %p372 = pneg %p371
      $region82: #{tpu_custom_call.1} parent=5 // pred_check_branch
        %374 = sbr.rel (%p372) target = $region84
      $region83: #{tpu_custom_call.1} parent=5 // pred_region
        %s375 = ssub.s32 %s8, 2
        // Predicated region
        $region85: #{tpu_custom_call.1} parent=83 // pred_check
          %p376 = pneg %p89
        $region86: #{tpu_custom_call.1} parent=83 // pred_check_branch
          %378 = sbr.rel (%p376) target = $region88
        $region87: #{tpu_custom_call.1} parent=83 // pred_region
          %s379 = sand.u32 %s74, 1
          %s380 = sand.u32 %s74, 1
          %s381 = smul.addr %s380, 32
          %s382 = scalar_lea.vmem [#allocation2], %s381
        $region88: #{tpu_custom_call.1} parent=83 // pred_fallthru
          _
      $region84: #{tpu_custom_call.1} parent=5 // pred_fallthru
        _
    $region6: #{tpu_custom_call.1} parent=1 // loop_footer
      %s12 = sadd.s32 1, %s8
    $region7: #{tpu_custom_call.1} parent=1 // loop_footer_branch
      %7 = sbr.rel target = $region3
    $region8: #{tpu_custom_call.1} parent=1 // loop_exit
      _

</llo_original>
